<compile_context>
chip_gen: v7x
topology: tpu7x:2x2x1
jax: 0.10.0
libtpu: 0.0.40
codegen_flags: <defaults>
</compile_context>

<pallas_src>
import functools

import jax
import jax.numpy as jnp
from jax import lax
from jax.experimental import pallas as pl
from jax.experimental.pallas import tpu as pltpu

LANES = 128
TILE_ROWS_MAX = 4096          # 4096x128 f32 = 2 MiB per input per grid step
NUM_PARTIALS_MAX = 8          # leading "parallel" axis -> balances v7x's 2 TCs
VMEM_LIMIT_BYTES = 32 * 1024 * 1024   # >= every chip's scoped default need


def _round_up(x: int, m: int) -> int:
    return (x + m - 1) // m * m


def _choose_partials(blocks: int, cap: int) -> int:
    """Pick the partial-sum count: prefer a divisor of `blocks` (no duplicate
    clamped blocks), then the fewest duplicates, then the most partials."""
    if blocks <= 1:
        return 1
    cap = min(cap, blocks)
    best_div = max(p for p in range(1, cap + 1) if blocks % p == 0)
    if best_div > 1:
        return best_div
    # blocks is prime and > cap: accept a few duplicate (skipped) blocks.
    return min(range(2, cap + 1),
               key=lambda p: (p * (-(-blocks // p)) - blocks, -p))


def _l1_partial_kernel(x_ref, y_ref, o_ref, *, tile_rows, valid_rows, blocks,
                       blocks_per_partial, last_full, ragged, guard_fast):
    """Accumulate per-partial sum(|x - y|) into a vreg-shaped (8,128) block."""
    p = pl.program_id(0)   # parallel partial-sum index
    j = pl.program_id(1)   # reduction step within this partial

    @pl.when(j == 0)
    def _():
        o_ref[...] = jnp.zeros_like(o_ref)

    def absdiff():
        return jnp.abs(x_ref[...].astype(jnp.float32)
                       - y_ref[...].astype(jnp.float32))

    def fold(a):
        # (tile_rows,128) -> (8,128): pure VPU vreg adds (no per-step XLU).
        return jnp.sum(a.reshape(tile_rows // 8, 8, LANES), axis=0)

    b = p * blocks_per_partial + j   # global (unclamped) block id

    # Fast path: fully in-bounds blocks need no row mask.
    if last_full > 0:
        if guard_fast:
            @pl.when(b < last_full)
            def _():
                o_ref[...] += fold(absdiff())
        else:
            # No ragged tail and no duplicates: every block is a fast block.
            o_ref[...] += fold(absdiff())

    # Slow path: only the single ragged tail block pays the row mask.
    if ragged:
        @pl.when(b == blocks - 1)
        def _():
            row0 = (blocks - 1) * tile_rows
            row_ids = row0 + lax.broadcasted_iota(jnp.int32,
                                                  (tile_rows, LANES), 0)
            o_ref[...] += fold(jnp.where(row_ids < valid_rows, absdiff(), 0.0))

    # Duplicate clamped blocks (b >= blocks) are skipped entirely.


@jax.jit
def l1_loss(pred: jax.Array, target: jax.Array) -> jax.Array:
    """torch.nn.L1Loss()(pred, target) equivalent (reduction='mean').

    Accepts f32 / bf16 / f16 inputs directly; accumulation is always f32.
    """
    assert pred.shape == target.shape
    n = pred.size  # static Python int at trace time
    assert n > 0

    x = pred.reshape(-1)
    y = target.reshape(-1)

    lane_pad = (-n) % LANES
    if lane_pad:
        # Rare path: tiny (<128 elem) zero pad so the flat view reshapes to
        # (rows, 128); |0-0| = 0 so semantics are unchanged.
        x = jnp.pad(x, (0, lane_pad))
        y = jnp.pad(y, (0, lane_pad))
    rows = (n + lane_pad) // LANES
    x2 = x.reshape(rows, LANES)
    y2 = y.reshape(rows, LANES)

    # Sublane multiple for the narrowest input dtype (f32->8, bf16->16, i8->32)
    # so the BlockSpec block shape stays layout-legal.
    sub = max(8 * max(1, 4 // a.dtype.itemsize) for a in (x2, y2))
    tile_rows = min(TILE_ROWS_MAX, _round_up(rows, sub))

    blocks = pl.cdiv(rows, tile_rows)
    partials = _choose_partials(blocks, NUM_PARTIALS_MAX)
    j_steps = pl.cdiv(blocks, partials)
    has_duplicates = blocks != partials * j_steps
    ragged = (rows % tile_rows) != 0
    last_full = blocks - 1 if ragged else blocks
    guard_fast = ragged or has_duplicates

    if has_duplicates:
        # Clamp so a duplicate block never DMAs out of range; it is skipped
        # inside the kernel (only wasted bandwidth, minimized by the divisor
        # choice above).
        def in_map(p, j):
            return (jnp.minimum(p * j_steps + j, blocks - 1), 0)
    else:
        def in_map(p, j):
            return (p * j_steps + j, 0)

    kernel = functools.partial(
        _l1_partial_kernel,
        tile_rows=tile_rows,
        valid_rows=rows,
        blocks=blocks,
        blocks_per_partial=j_steps,
        last_full=last_full,
        ragged=ragged,
        guard_fast=guard_fast,
    )

    in_bytes = x2.size * x2.dtype.itemsize + y2.size * y2.dtype.itemsize
    out_bytes = partials * 8 * LANES * 4
    cost = pl.CostEstimate(flops=3 * n, transcendentals=0,
                           bytes_accessed=in_bytes + out_bytes)

    partial_sums = pl.pallas_call(
        kernel,
        out_shape=jax.ShapeDtypeStruct((partials * 8, LANES), jnp.float32),
        grid=(partials, j_steps),
        in_specs=[
            pl.BlockSpec((tile_rows, LANES), in_map),
            pl.BlockSpec((tile_rows, LANES), in_map),
        ],
        # Lane-dense (8,128) output block, resident across the reduction axis.
        out_specs=pl.BlockSpec((8, LANES), lambda p, j: (p, 0)),
        compiler_params=pltpu.CompilerParams(
            dimension_semantics=("parallel", "arbitrary"),
            vmem_limit_bytes=VMEM_LIMIT_BYTES,
        ),
        cost_estimate=cost,
    )(x2, y2)

    # Single tiny cross-lane reduce + mean over the TRUE element count.
    return jnp.sum(partial_sums) / n


class AutoencoderBase:
    """JAX/Pallas mirror of acai.autoencoders.base.AutoencoderBase."""

    def __init__(self):
        # torch.nn.L1Loss() has no parameters; deterministic by construction.
        self.compute_loss = l1_loss

    def forward(self, images):
        raise NotImplementedError()


if __name__ == "__main__":
    key = jax.random.PRNGKey(0)
    k1, k2, k3, k4, k5, k6 = jax.random.split(key, 6)

    model = AutoencoderBase()

    # 1) Small NCHW shapes consistent with an image autoencoder (single block,
    #    unmasked fast path).
    images = jax.random.normal(k1, (2, 4, 16, 16), dtype=jnp.float32)
    recon = jax.random.normal(k2, (2, 4, 16, 16), dtype=jnp.float32)
    loss = jax.block_until_ready(model.compute_loss(recon, images))
    ref = jnp.mean(jnp.abs(recon - images))
    assert jnp.allclose(loss, ref, rtol=1e-5, atol=1e-6), (loss, ref)

    # 2) Ragged-tail path: row count not a multiple of the sublane tile, so the
    #    final (only) block is masked inside the kernel.
    imgs2 = jax.random.normal(k3, (2, 10, 125, 128), dtype=jnp.float32)
    rec2 = jax.random.normal(k4, (2, 10, 125, 128), dtype=jnp.float32)
    loss2 = jax.block_until_ready(model.compute_loss(rec2, imgs2))
    ref2 = jnp.mean(jnp.abs(rec2 - imgs2))
    assert jnp.allclose(loss2, ref2, rtol=1e-5, atol=1e-6), (loss2, ref2)

    # 3) bf16 inputs, multi-block: exercises the parallel partial split, the
    #    unmasked fast path AND the masked tail block together.
    imgs3 = jax.random.normal(k5, (4, 3, 224, 224), dtype=jnp.bfloat16)
    rec3 = jax.random.normal(k6, (4, 3, 224, 224), dtype=jnp.bfloat16)
    loss3 = jax.block_until_ready(model.compute_loss(rec3, imgs3))
    ref3 = jnp.mean(jnp.abs(rec3.astype(jnp.float32) - imgs3.astype(jnp.float32)))
    assert jnp.allclose(loss3, ref3, rtol=1e-4, atol=1e-6), (loss3, ref3)

    print("KERNEL_OK")
</pallas_src>

<mosaic_0001>
module attributes {stable_mosaic.version = 11 : i64} {
  func.func @_l1_partial_kernel(%arg0: i32, %arg1: i32, %arg2: memref<16x128xf32, #tpu.memory_space<vmem>>, %arg3: memref<16x128xf32, #tpu.memory_space<vmem>>, %arg4: memref<8x128xf32, #tpu.memory_space<vmem>>) attributes {dimension_semantics = [#tpu.dimension_semantics<parallel>, #tpu.dimension_semantics<arbitrary>], iteration_bounds = array<i64: 1, 1>, scalar_prefetch = 0 : i64, scratch_operands = 0 : i64, tpu.core_type = #tpu.core_type<tc>, window_params = [{transform_indices = @transform_0, window_bounds = array<i64: 16, 128>}, {transform_indices = @transform_1, window_bounds = array<i64: 16, 128>}, {transform_indices = @transform_2, window_bounds = array<i64: 8, 128>}]} {
    %c0_i32 = arith.constant 0 : i32
    %0 = arith.cmpi eq, %arg1, %c0_i32 : i32
    %1 = arith.extui %0 : i1 to i32
    %c0_i32_0 = arith.constant 0 : i32
    %2 = arith.cmpi ne, %1, %c0_i32_0 : i32
    scf.if %2 {
      %cst_8 = arith.constant 0.000000e+00 : f32
      %12 = vector.broadcast %cst_8 : f32 to vector<8x128xf32>
      %c0_9 = arith.constant 0 : index
      %c0_10 = arith.constant 0 : index
      %13 = vector.load %arg4[%c0_9, %c0_10] : memref<8x128xf32, #tpu.memory_space<vmem>>, vector<8x128xf32>
      tpu.vector_store %arg4[%c0_9, %c0_10], %12 {strides = array<i32>} : memref<8x128xf32, #tpu.memory_space<vmem>>, vector<8x128xf32>,
    } else {
    }
    %c0 = arith.constant 0 : index
    %c0_1 = arith.constant 0 : index
    %3 = vector.load %arg4[%c0, %c0_1] : memref<8x128xf32, #tpu.memory_space<vmem>>, vector<8x128xf32>
    %c0_2 = arith.constant 0 : index
    %c0_3 = arith.constant 0 : index
    %4 = vector.load %arg2[%c0_2, %c0_3] : memref<16x128xf32, #tpu.memory_space<vmem>>, vector<16x128xf32>
    %c0_4 = arith.constant 0 : index
    %c0_5 = arith.constant 0 : index
    %5 = vector.load %arg3[%c0_4, %c0_5] : memref<16x128xf32, #tpu.memory_space<vmem>>, vector<16x128xf32>
    %6 = arith.subf %4, %5 : vector<16x128xf32>
    %7 = math.absf %6 : vector<16x128xf32>
    %8 = vector.shape_cast %7 : vector<16x128xf32> to vector<2x8x128xf32>
    %cst = arith.constant dense<0.000000e+00> : vector<8x128xf32>
    %9 = vector.multi_reduction <add>, %8, %cst [0] : vector<2x8x128xf32> to vector<8x128xf32>
    %10 = arith.addf %3, %9 : vector<8x128xf32>
    %c0_6 = arith.constant 0 : index
    %c0_7 = arith.constant 0 : index
    %11 = vector.load %arg4[%c0_6, %c0_7] : memref<8x128xf32, #tpu.memory_space<vmem>>, vector<8x128xf32>
    tpu.vector_store %arg4[%c0_6, %c0_7], %10 {strides = array<i32>} : memref<8x128xf32, #tpu.memory_space<vmem>>, vector<8x128xf32>,
    return
  }
  func.func @transform_0(%arg0: i32, %arg1: i32) -> (i32, i32) {
    %c1_i32 = arith.constant 1 : i32
    %0 = arith.muli %arg0, %c1_i32 : i32
    %1 = arith.addi %0, %arg1 : i32
    %c0_i32 = arith.constant 0 : i32
    %c0_i32_0 = arith.constant 0 : i32
    return %1, %c0_i32 : i32, i32
  }
  func.func @transform_1(%arg0: i32, %arg1: i32) -> (i32, i32) {
    %c1_i32 = arith.constant 1 : i32
    %0 = arith.muli %arg0, %c1_i32 : i32
    %1 = arith.addi %0, %arg1 : i32
    %c0_i32 = arith.constant 0 : i32
    %c0_i32_0 = arith.constant 0 : i32
    return %1, %c0_i32 : i32, i32
  }
  func.func @transform_2(%arg0: i32, %arg1: i32) -> (i32, i32) {
    %c0_i32 = arith.constant 0 : i32
    %c0_i32_0 = arith.constant 0 : i32
    return %arg0, %c0_i32 : i32, i32
  }
}

</mosaic_0001>

<llo_original>
// kernel: l1_loss.1
$region0: #{l1_loss.1}
  #allocation0 [shape = 'u32[]', space=smem, size = 0x4, offset = 0x4, fixed_abs, tag = 'smem constant byte address 0x4 - core index']
  #allocation1 [shape = 'u32[144,128]{1,0:T(1,128)}', space=vmem, size = 0x12000, scoped, tag = 'internal scratch']
  %s0 = inlined_call_operand.vmem [shape: f32[16,128], index: 0, kind: input, shape index: {}]
  %s1 = inlined_call_operand.vmem [shape: f32[16,128], index: 1, kind: input, shape index: {}]
  %s2 = inlined_call_operand.vmem [shape: f32[8,128], index: 2, kind: output, shape index: {}]
  %s3 = sld [smem:[#allocation0]]
  $region22: #{l1_loss.1} parent=0
    _
  %s5 = ssub.s32 1, %s3
  %s6 = scalar_select 0, %s5, %s3
  // Predicated region
  $region2: #{l1_loss.1} parent=0 // pred_check
    _
  $region3: #{l1_loss.1} parent=0 // pred_check_branch
    %8 = sbr.rel (0) target = $region5
  $region4: #{l1_loss.1} parent=0 // pred_region
    %s9 = sadd.s32 0, 0
    %s10 = smul.u32 2, %s9
    %p11 = scmp.lt.s32.totalorder %s10, 1
    %s12 = scalar_select %p11, %s10, 1
    %s13 = smul.addr %s12, 8
    %s14 = scalar_lea.vmem %s0, %s13
    %s15 = sadd.s32 0, 0
    %s16 = smul.u32 2, %s15
  $region5: #{l1_loss.1} parent=0 // pred_fallthru
    _
  // Predicated region
  $region6: #{l1_loss.1} parent=0 // pred_check
    _
  $region7: #{l1_loss.1} parent=0 // pred_check_branch
    %18 = sbr.rel (0) target = $region9
  $region8: #{l1_loss.1} parent=0 // pred_region
    %s19 = sadd.s32 0, 0
    %s20 = smul.u32 2, %s19
    %p21 = scmp.lt.s32.totalorder %s20, 1
    %s22 = scalar_select %p21, %s20, 1
    %s23 = smul.addr %s22, 8
    %s24 = scalar_lea.vmem %s1, %s23
    %s25 = sadd.s32 0, 0
    %s26 = smul.u32 2, %s25
  $region9: #{l1_loss.1} parent=0 // pred_fallthru
    _
  %s27 = sadd.s32 0, 0
  %s28 = smul.u32 2, %s27
  %p29 = scmp.lt.s32.totalorder %s28, 1
  %s30 = scalar_select %p29, %s28, 1
  %s31 = smul.addr %s30, 8
  %s32 = scalar_lea.vmem %s0, %s31
  %s33 = sadd.s32 0, 0
  %s34 = smul.u32 2, %s33
  %p35 = scmp.lt.s32.totalorder %s34, 1
  %s36 = scalar_select %p35, %s34, 1
  %s37 = smul.addr %s36, 8
  %s38 = scalar_lea.vmem %s1, %s37
  %s39 = sadd.s32 0, 0
  %s40 = smul.u32 2, %s39
  %p41 = scmp.lt.s32.totalorder %s40, 1
  %s42 = scalar_select %p41, %s40, 1
  %s43 = smul.addr %s42, 8
  %s44 = scalar_lea.vmem %s0, %s43
  %s45 = sadd.s32 0, 0
  %s46 = smul.u32 2, %s45
  %s47 = sadd.s32 0, 0
  %s48 = smul.u32 2, %s47
  %p49 = scmp.lt.s32.totalorder %s48, 1
  %s50 = scalar_select %p49, %s48, 1
  %s51 = smul.addr %s50, 8
  %s52 = scalar_lea.vmem %s1, %s51
  %s53 = sadd.s32 0, 0
  %s54 = smul.u32 2, %s53
  %p55 = scmp.eq.s32.totalorder 0, 0
  // Predicated region
  $region10: #{l1_loss.1} parent=0 // pred_check
    %p56 = pneg %p55
  $region11: #{l1_loss.1} parent=0 // pred_check_branch
    %58 = sbr.rel (%p56) target = $region13
  $region12: #{l1_loss.1} parent=0 // pred_region
    %59 = vst [vmem:[%s2] sm:$0xff] 0.0
  $region13: #{l1_loss.1} parent=0 // pred_fallthru
    _
  %v60 = vld [vmem:[%s2] sm:$0xff]
  %v61 = vld [vmem:[%s44] sm:$0xff]
  %v62 = vld [vmem:[%s44 + $0x8] sm:$0xff]
  %v63 = vld [vmem:[%s52] sm:$0xff]
  %v64 = vld [vmem:[%s52 + $0x8] sm:$0xff]
  %v65 = vsub.f32 %v61, %v63
  %v66 = vsub.f32 %v62, %v64
  %v67 = vand.u32 2147483647, %v65
  %v68 = vand.u32 2147483647, %v66
  %v69 = vadd.f32 %v67, %v68
  %v70 = vadd.f32 %v60, %v69
  %71 = vst [vmem:[%s2] sm:$0xff] %v70
  // Predicated region
  $region14: #{l1_loss.1} parent=0 // pred_check
    _
  $region15: #{l1_loss.1} parent=0 // pred_check_branch
    %73 = sbr.rel (0) target = $region17
  $region16: #{l1_loss.1} parent=0 // pred_region
    _
  $region17: #{l1_loss.1} parent=0 // pred_fallthru
    _
  // Predicated region
  $region18: #{l1_loss.1} parent=0 // pred_check
    _
  $region19: #{l1_loss.1} parent=0 // pred_check_branch
    %75 = sbr.rel (0) target = $region21
  $region20: #{l1_loss.1} parent=0 // pred_region
    _
  $region21: #{l1_loss.1} parent=0 // pred_fallthru
    _

</llo_original>
